<compile_context>
chip_gen: v5e
topology: v5e:2x2
jax: 0.10.0
libtpu: 0.0.40
codegen_flags: <defaults>
</compile_context>

<pallas_src>
import jax
import jax.numpy as jnp
from jax.experimental import pallas as pl
from jax.experimental.pallas import tpu as pltpu


# --------------------------------------------------------------------------- #
# Kernel                                                                      #
# --------------------------------------------------------------------------- #
def _gcn_kernel(adj_ref, x_ref, w_ref, b_ref, o_ref, acc_ref):
    """One (row-tile, k-tile) step of the fused GCN layer.

    adj_ref: (tm, tk)     bf16  adjacency tile (rows i*tm.., cols k*tk..)
    x_ref:   (tk, B*D)    bf16  batch-folded signal rows for this k tile
    w_ref:   (B*D, B*F)   bf16  block-diagonal folded nn.Linear weight
    b_ref:   (1, B*F)     f32   folded bias
    o_ref:   (tm, B*F)    f32   folded output rows (lane-dense store)
    acc_ref: (tm, B*D)    f32   VMEM accumulator for adj @ x over the k axis
    """
    k = pl.program_id(1)

    @pl.when(k == 0)
    def _():
        acc_ref[...] = jnp.zeros_like(acc_ref)

    # (1) Neighborhood aggregation for ALL batch elements in one bf16 MXU GEMM
    #     with f32 accumulation: (tm, tk) @ (tk, B*D) -> (tm, B*D).
    acc_ref[...] += jnp.dot(adj_ref[...], x_ref[...],
                            preferred_element_type=jnp.float32)

    @pl.when(k == pl.num_programs(1) - 1)
    def _():
        # (2) nn.Linear via the block-diagonal folded weight: one lane-dense
        #     GEMM, no unfold, no scratch round trip.
        y = jnp.dot(acc_ref[...].astype(jnp.bfloat16), w_ref[...],
                    preferred_element_type=jnp.float32)
        # (3) Bias + ReLU epilogue in f32 (v5e-safe), single lane-dense store.
        o_ref[...] = jnp.maximum(y + b_ref[...], 0.0).astype(o_ref.dtype)


# --------------------------------------------------------------------------- #
# Tiling plan                                                                 #
# --------------------------------------------------------------------------- #
def _round_up(n, m):
    return -(-n // m) * m


def _vmem_budget_and_limit():
    cap = 64 * 1024 * 1024                      # conservative default (v7x)
    try:
        cap = int(pltpu.get_tpu_info().vmem_capacity_bytes)
    except Exception:
        pass
    budget = int(cap * 0.70)                    # per-step working-set budget
    limit = min(int(cap * 0.85), 100 * 1024 * 1024)
    return budget, limit


def _plan_tiles(N, B, D, F, budget, row_tile=None, k_tile=None):
    """Return (tm, tk, n_pad): row tile, K tile and padded graph size."""
    bd, bf = B * D, B * F

    def fits(tm, tk, nk):
        use = (2 * tm * tk * 2                       # adj tile, bf16, 2 buffers
               + (1 if nk == 1 else 2) * tk * bd * 2  # x_fold tile, bf16
               + bd * bf * 2                          # folded weight (1 buffer)
               + bf * 4                               # bias
               + 2 * tm * bf * 4                      # output tile, f32, 2 bufs
               + tm * bd * 4)                         # f32 accumulator scratch
        return use <= budget

    if row_tile is not None or k_tile is not None:
        tm = row_tile if row_tile is not None else min(256, _round_up(max(N, 8), 8))
        if k_tile is None:
            n_pad = _round_up(max(N, 8), tm)
            return tm, n_pad, n_pad
        tk = k_tile
        step = max(tm, tk) if max(tm, tk) % min(tm, tk) == 0 else tm * tk
        return tm, tk, _round_up(max(N, 8), step)

    cands = [t for t in (512, 256, 128, 64, 32, 16, 8)
             if t <= _round_up(max(N, 8), 8)]
    if not cands:
        cands = [8]

    # 1) Prefer keeping the whole contraction resident (tk = N_pad, one K step).
    for tm in cands:
        n_pad = _round_up(max(N, 8), tm)
        if fits(tm, n_pad, 1):
            return tm, n_pad, n_pad
    # 2) Otherwise tile the contraction (K) axis in lane-aligned chunks.
    for tk in (2048, 1024, 512, 256, 128):
        for tm in cands:
            step = max(tm, tk)                      # both powers of two
            n_pad = _round_up(max(N, 8), step)
            if fits(tm, tk, n_pad // tk):
                return tm, tk, n_pad
    # Last resort: minimum legal tiles.
    return 8, 128, _round_up(max(N, 8), 128)


# --------------------------------------------------------------------------- #
# Wrapper                                                                     #
# --------------------------------------------------------------------------- #
def gcn_layer(x, adj, weight, bias, *, row_tile=None, k_tile=None):
    """Fused GCN layer.

    x:      (B, N, D) f32   (B = batch_size * T, already fully folded — this
                             also maximizes MXU lane fill B*D / B*F on v6e/v7x)
    adj:    (N, N)    f32
    weight: (F, D)    f32   nn.Linear weight (PyTorch layout)
    bias:   (F,)      f32
    returns (B, N, F) f32 == ReLU(Linear(adj @ x))
    """
    B, N, D = x.shape
    F = weight.shape[0]
    BD, BF = B * D, B * F

    budget, vmem_limit = _vmem_budget_and_limit()
    tm, tk, n_pad = _plan_tiles(N, B, D, F, budget, row_tile, k_tile)
    assert tm % 8 == 0 or tm == n_pad, "row tile must be a multiple of 8"
    assert tk == n_pad or tk % 128 == 0, "K tile must be lane-aligned (x128)"
    nk = n_pad // tk

    # Batch folded into lanes: x_fold[n, b*D + d] = x[b, n, d].
    x_fold = jnp.transpose(x.astype(jnp.float32), (1, 0, 2)).reshape(N, BD)
    adj_f = jnp.asarray(adj, jnp.float32)
    if n_pad != N:                       # zero-pad awkward N (never tm=8 cliff)
        x_fold = jnp.pad(x_fold, ((0, n_pad - N), (0, 0)))
        adj_f = jnp.pad(adj_f, ((0, n_pad - N), (0, n_pad - N)))
    adj_bf = adj_f.astype(jnp.bfloat16)
    x_bf = x_fold.astype(jnp.bfloat16)

    # Block-diagonal folded weight: w_fold[b*D+d, b*F+f] = weight[f, d].
    eye = jnp.eye(B, dtype=jnp.float32)
    w_fold = jnp.einsum("bc,df->bdcf", eye,
                        jnp.transpose(weight).astype(jnp.float32))
    w_fold = w_fold.reshape(BD, BF).astype(jnp.bfloat16)
    b_fold = jnp.tile(bias.astype(jnp.float32), B).reshape(1, BF)

    flops = 2 * n_pad * n_pad * BD + 2 * n_pad * BD * BF
    bytes_accessed = (2 * n_pad * n_pad + 2 * n_pad * BD + 2 * BD * BF
                      + 4 * BF + 4 * n_pad * BF)

    def _call(single_buffer_invariant):
        pm = ({"pipeline_mode": pl.Buffered(1)}
              if single_buffer_invariant else {})
        x_pm = pm if nk == 1 else {}     # x_fold is grid-invariant only if nk==1
        return pl.pallas_call(
            _gcn_kernel,
            out_shape=jax.ShapeDtypeStruct((n_pad, BF), jnp.float32),
            grid_spec=pltpu.PrefetchScalarGridSpec(
                num_scalar_prefetch=0,
                grid=(n_pad // tm, nk),                       # (rows, K) — K last
                in_specs=[
                    pl.BlockSpec((tm, tk), lambda i, k: (i, k)),        # adj
                    pl.BlockSpec((tk, BD), lambda i, k: (k, 0), **x_pm),  # x_fold
                    pl.BlockSpec((BD, BF), lambda i, k: (0, 0), **pm),  # weight
                    pl.BlockSpec((1, BF), lambda i, k: (0, 0), **pm),   # bias
                ],
                out_specs=pl.BlockSpec((tm, BF), lambda i, k: (i, 0)),
                scratch_shapes=[pltpu.VMEM((tm, BD), jnp.float32)],
            ),
            compiler_params=pltpu.CompilerParams(
                dimension_semantics=("parallel", "arbitrary"),
                vmem_limit_bytes=vmem_limit),
            cost_estimate=pl.CostEstimate(
                flops=flops, transcendentals=0, bytes_accessed=bytes_accessed),
        )(adj_bf, x_bf, w_fold, b_fold)

    try:
        out_fold = _call(True)
    except Exception:
        # TODO(synk): drop this fallback once pl.Buffered(1) single-buffering of
        # grid-invariant blocks is confirmed on every deployed jax version.
        out_fold = _call(False)

    # Unfold the lane-dense (N_pad, B*F) slab back to (B, N, F).
    out = out_fold[:N].reshape(N, B, F)
    return jnp.transpose(out, (1, 0, 2))


def gcn_layer_ref(x, adj, weight, bias):
    """Pure-JAX f32 reference matching torch: bmm(adj.repeat, x) -> Linear -> ReLU."""
    ax = jnp.einsum("nm,bmd->bnd", adj, x)
    y = jnp.einsum("bnd,fd->bnf", ax, weight) + bias
    return jnp.maximum(y, 0.0)


# --------------------------------------------------------------------------- #
# Self-test                                                                   #
# --------------------------------------------------------------------------- #
if __name__ == "__main__":
    def make_inputs(key, B, N, D, F):
        kx, ka, kw, kb = jax.random.split(key, 4)
        x = jax.random.normal(kx, (B, N, D), dtype=jnp.float32)
        adj = jax.random.uniform(ka, (N, N), dtype=jnp.float32)
        bound = 1.0 / jnp.sqrt(jnp.float32(D))     # nn.Linear-style init
        weight = jax.random.uniform(kw, (F, D), minval=-bound, maxval=bound,
                                    dtype=jnp.float32)
        bias = jax.random.uniform(kb, (F,), minval=-bound, maxval=bound,
                                  dtype=jnp.float32)
        return x, adj, weight, bias

    # bf16 MXU inputs with f32 accumulation -> loose-but-safe tolerances.
    TOL = dict(atol=6e-2, rtol=6e-2)

    # 1) Small shapes consistent with the module: (batch*T, N, D) -> (.., N, F).
    B, N, D, F = 2, 16, 8, 32
    x, adj, weight, bias = make_inputs(jax.random.PRNGKey(0), B, N, D, F)
    out = jax.block_until_ready(gcn_layer(x, adj, weight, bias))
    ref = gcn_layer_ref(x, adj, weight, bias)
    assert out.shape == (B, N, F)
    assert jnp.allclose(out, ref, **TOL), float(jnp.max(jnp.abs(out - ref)))

    # 2) Awkward N (pad/mask path) with the automatic, budget-driven tiler.
    B2, N2, D2, F2 = 4, 20, 16, 32
    x2, adj2, w2, b2 = make_inputs(jax.random.PRNGKey(1), B2, N2, D2, F2)
    out2 = jax.block_until_ready(gcn_layer(x2, adj2, w2, b2))
    ref2 = gcn_layer_ref(x2, adj2, w2, b2)
    assert out2.shape == (B2, N2, F2)
    assert jnp.allclose(out2, ref2, **TOL), float(jnp.max(jnp.abs(out2 - ref2)))

    # 3) Multi row-tile + tiled contraction (K) axis exercising the accumulator.
    B3, N3, D3, F3 = 2, 256, 16, 32
    x3, adj3, w3, b3 = make_inputs(jax.random.PRNGKey(2), B3, N3, D3, F3)
    out3 = jax.block_until_ready(gcn_layer(x3, adj3, w3, b3,
                                           row_tile=64, k_tile=128))
    ref3 = gcn_layer_ref(x3, adj3, w3, b3)
    assert out3.shape == (B3, N3, F3)
    assert jnp.allclose(out3, ref3, **TOL), float(jnp.max(jnp.abs(out3 - ref3)))

    print("KERNEL_OK")
</pallas_src>

<mosaic_0001>
module attributes {stable_mosaic.version = 11 : i64} {
  func.func @_gcn_kernel(%arg0: i32, %arg1: i32, %arg2: memref<16x16xbf16, #tpu.memory_space<vmem>>, %arg3: memref<16x16xbf16, #tpu.memory_space<vmem>>, %arg4: memref<16x64xbf16, #tpu.memory_space<vmem>>, %arg5: memref<1x64xf32, #tpu.memory_space<vmem>>, %arg6: memref<16x64xf32, #tpu.memory_space<vmem>>, %arg7: memref<16x16xf32, #tpu.memory_space<vmem>>) attributes {dimension_semantics = [#tpu.dimension_semantics<parallel>, #tpu.dimension_semantics<arbitrary>], iteration_bounds = array<i64: 1, 1>, scalar_prefetch = 0 : i64, scratch_operands = 1 : i64, tpu.core_type = #tpu.core_type<tc>, window_params = [{transform_indices = @transform_0, window_bounds = array<i64: 16, 16>}, {pipeline_mode = #tpu.pipeline_mode<synchronous>, transform_indices = @transform_1, window_bounds = array<i64: 16, 16>}, {pipeline_mode = #tpu.pipeline_mode<synchronous>, transform_indices = @transform_2, window_bounds = array<i64: 16, 64>}, {pipeline_mode = #tpu.pipeline_mode<synchronous>, transform_indices = @transform_3, window_bounds = array<i64: 1, 64>}, {transform_indices = @transform_4, window_bounds = array<i64: 16, 64>}]} {
    %c0_i32 = arith.constant 0 : i32
    %0 = arith.cmpi eq, %arg1, %c0_i32 : i32
    %1 = arith.extui %0 : i1 to i32
    %c0_i32_0 = arith.constant 0 : i32
    %2 = arith.cmpi ne, %1, %c0_i32_0 : i32
    scf.if %2 {
      %cst_10 = arith.constant 0.000000e+00 : f32
      %12 = vector.broadcast %cst_10 : f32 to vector<16x16xf32>
      %c0_11 = arith.constant 0 : index
      %c0_12 = arith.constant 0 : index
      %13 = vector.load %arg7[%c0_11, %c0_12] : memref<16x16xf32, #tpu.memory_space<vmem>>, vector<16x16xf32>
      tpu.vector_store %arg7[%c0_11, %c0_12], %12 {strides = array<i32>} : memref<16x16xf32, #tpu.memory_space<vmem>>, vector<16x16xf32>,
    } else {
    }
    %c0 = arith.constant 0 : index
    %c0_1 = arith.constant 0 : index
    %3 = vector.load %arg7[%c0, %c0_1] : memref<16x16xf32, #tpu.memory_space<vmem>>, vector<16x16xf32>
    %c0_2 = arith.constant 0 : index
    %c0_3 = arith.constant 0 : index
    %4 = vector.load %arg2[%c0_2, %c0_3] : memref<16x16xbf16, #tpu.memory_space<vmem>>, vector<16x16xbf16>
    %c0_4 = arith.constant 0 : index
    %c0_5 = arith.constant 0 : index
    %5 = vector.load %arg3[%c0_4, %c0_5] : memref<16x16xbf16, #tpu.memory_space<vmem>>, vector<16x16xbf16>
    %cst = arith.constant dense<0.000000e+00> : vector<16x16xf32>
    %6 = tpu.matmul %4, %5, %cst {dimension_numbers = #tpu.dot_dimension_numbers<[1], [0], [0], [1], [0, 0, 1, 1], [], []>} : vector<16x16xbf16>, vector<16x16xbf16>, vector<16x16xf32> -> vector<16x16xf32>
    %7 = arith.addf %3, %6 : vector<16x16xf32>
    %c0_6 = arith.constant 0 : index
    %c0_7 = arith.constant 0 : index
    %8 = vector.load %arg7[%c0_6, %c0_7] : memref<16x16xf32, #tpu.memory_space<vmem>>, vector<16x16xf32>
    tpu.vector_store %arg7[%c0_6, %c0_7], %7 {strides = array<i32>} : memref<16x16xf32, #tpu.memory_space<vmem>>, vector<16x16xf32>,
    %c0_i32_8 = arith.constant 0 : i32
    %9 = arith.cmpi eq, %arg1, %c0_i32_8 : i32
    %10 = arith.extui %9 : i1 to i32
    %c0_i32_9 = arith.constant 0 : i32
    %11 = arith.cmpi ne, %10, %c0_i32_9 : i32
    scf.if %11 {
      %c0_10 = arith.constant 0 : index
      %c0_11 = arith.constant 0 : index
      %12 = vector.load %arg7[%c0_10, %c0_11] : memref<16x16xf32, #tpu.memory_space<vmem>>, vector<16x16xf32>
      %13 = arith.truncf %12 : vector<16x16xf32> to vector<16x16xbf16>
      %c0_12 = arith.constant 0 : index
      %c0_13 = arith.constant 0 : index
      %14 = vector.load %arg4[%c0_12, %c0_13] : memref<16x64xbf16, #tpu.memory_space<vmem>>, vector<16x64xbf16>
      %cst_14 = arith.constant dense<0.000000e+00> : vector<16x64xf32>
      %15 = tpu.matmul %13, %14, %cst_14 {dimension_numbers = #tpu.dot_dimension_numbers<[1], [0], [0], [1], [0, 0, 1, 1], [], []>} : vector<16x16xbf16>, vector<16x64xbf16>, vector<16x64xf32> -> vector<16x64xf32>
      %c0_15 = arith.constant 0 : index
      %c0_16 = arith.constant 0 : index
      %16 = vector.load %arg5[%c0_15, %c0_16] : memref<1x64xf32, #tpu.memory_space<vmem>>, vector<1x64xf32>
      %17 = vector.broadcast %16 : vector<1x64xf32> to vector<16x64xf32>
      %18 = arith.addf %15, %17 : vector<16x64xf32>
      %cst_17 = arith.constant 0.000000e+00 : f32
      %19 = vector.broadcast %cst_17 : f32 to vector<16x64xf32>
      %20 = arith.maximumf %18, %19 : vector<16x64xf32>
      %c0_18 = arith.constant 0 : index
      %c0_19 = arith.constant 0 : index
      %21 = vector.load %arg6[%c0_18, %c0_19] : memref<16x64xf32, #tpu.memory_space<vmem>>, vector<16x64xf32>
      tpu.vector_store %arg6[%c0_18, %c0_19], %20 {strides = array<i32>} : memref<16x64xf32, #tpu.memory_space<vmem>>, vector<16x64xf32>,
    } else {
    }
    return
  }
  func.func @transform_0(%arg0: i32, %arg1: i32) -> (i32, i32) {
    %c0_i32 = arith.constant 0 : i32
    return %arg0, %arg1 : i32, i32
  }
  func.func @transform_1(%arg0: i32, %arg1: i32) -> (i32, i32) {
    %c0_i32 = arith.constant 0 : i32
    %c0_i32_0 = arith.constant 0 : i32
    return %arg1, %c0_i32 : i32, i32
  }
  func.func @transform_2(%arg0: i32, %arg1: i32) -> (i32, i32) {
    %c0_i32 = arith.constant 0 : i32
    %c0_i32_0 = arith.constant 0 : i32
    %c0_i32_1 = arith.constant 0 : i32
    return %c0_i32, %c0_i32_0 : i32, i32
  }
  func.func @transform_3(%arg0: i32, %arg1: i32) -> (i32, i32) {
    %c0_i32 = arith.constant 0 : i32
    %c0_i32_0 = arith.constant 0 : i32
    %c0_i32_1 = arith.constant 0 : i32
    return %c0_i32, %c0_i32_0 : i32, i32
  }
  func.func @transform_4(%arg0: i32, %arg1: i32) -> (i32, i32) {
    %c0_i32 = arith.constant 0 : i32
    %c0_i32_0 = arith.constant 0 : i32
    return %arg0, %c0_i32 : i32, i32
  }
}

module attributes {stable_mosaic.version = 11 : i64} {
  func.func @_gcn_kernel(%arg0: i32, %arg1: i32, %arg2: memref<16x16xbf16, #tpu.memory_space<vmem>>, %arg3: memref<16x16xbf16, #tpu.memory_space<vmem>>, %arg4: memref<16x64xbf16, #tpu.memory_space<vmem>>, %arg5: memref<1x64xf32, #tpu.memory_space<vmem>>, %arg6: memref<16x64xf32, #tpu.memory_space<vmem>>, %arg7: memref<16x16xf32, #tpu.memory_space<vmem>>) attributes {dimension_semantics = [#tpu.dimension_semantics<parallel>, #tpu.dimension_semantics<arbitrary>], iteration_bounds = array<i64: 1, 1>, scalar_prefetch = 0 : i64, scratch_operands = 1 : i64, tpu.core_type = #tpu.core_type<tc>, window_params = [{transform_indices = @transform_0, window_bounds = array<i64: 16, 16>}, {transform_indices = @transform_1, window_bounds = array<i64: 16, 16>}, {pipeline_mode = #tpu.pipeline_mode<synchronous>, transform_indices = @transform_2, window_bounds = array<i64: 16, 64>}, {pipeline_mode = #tpu.pipeline_mode<synchronous>, transform_indices = @transform_3, window_bounds = array<i64: 1, 64>}, {transform_indices = @transform_4, window_bounds = array<i64: 16, 64>}]} {
    %c0_i32 = arith.constant 0 : i32
    %0 = arith.cmpi eq, %arg1, %c0_i32 : i32
    %1 = arith.extui %0 : i1 to i32
    %c0_i32_0 = arith.constant 0 : i32
    %2 = arith.cmpi ne, %1, %c0_i32_0 : i32
    scf.if %2 {
      %cst_10 = arith.constant 0.000000e+00 : f32
      %12 = vector.broadcast %cst_10 : f32 to vector<16x16xf32>
      %c0_11 = arith.constant 0 : index
      %c0_12 = arith.constant 0 : index
      %13 = vector.load %arg7[%c0_11, %c0_12] : memref<16x16xf32, #tpu.memory_space<vmem>>, vector<16x16xf32>
      tpu.vector_store %arg7[%c0_11, %c0_12], %12 {strides = array<i32>} : memref<16x16xf32, #tpu.memory_space<vmem>>, vector<16x16xf32>,
    } else {
    }
    %c0 = arith.constant 0 : index
    %c0_1 = arith.constant 0 : index
    %3 = vector.load %arg7[%c0, %c0_1] : memref<16x16xf32, #tpu.memory_space<vmem>>, vector<16x16xf32>
    %c0_2 = arith.constant 0 : index
    %c0_3 = arith.constant 0 : index
    %4 = vector.load %arg2[%c0_2, %c0_3] : memref<16x16xbf16, #tpu.memory_space<vmem>>, vector<16x16xbf16>
    %c0_4 = arith.constant 0 : index
    %c0_5 = arith.constant 0 : index
    %5 = vector.load %arg3[%c0_4, %c0_5] : memref<16x16xbf16, #tpu.memory_space<vmem>>, vector<16x16xbf16>
    %cst = arith.constant dense<0.000000e+00> : vector<16x16xf32>
    %6 = tpu.matmul %4, %5, %cst {dimension_numbers = #tpu.dot_dimension_numbers<[1], [0], [0], [1], [0, 0, 1, 1], [], []>} : vector<16x16xbf16>, vector<16x16xbf16>, vector<16x16xf32> -> vector<16x16xf32>
    %7 = arith.addf %3, %6 : vector<16x16xf32>
    %c0_6 = arith.constant 0 : index
    %c0_7 = arith.constant 0 : index
    %8 = vector.load %arg7[%c0_6, %c0_7] : memref<16x16xf32, #tpu.memory_space<vmem>>, vector<16x16xf32>
    tpu.vector_store %arg7[%c0_6, %c0_7], %7 {strides = array<i32>} : memref<16x16xf32, #tpu.memory_space<vmem>>, vector<16x16xf32>,
    %c0_i32_8 = arith.constant 0 : i32
    %9 = arith.cmpi eq, %arg1, %c0_i32_8 : i32
    %10 = arith.extui %9 : i1 to i32
    %c0_i32_9 = arith.constant 0 : i32
    %11 = arith.cmpi ne, %10, %c0_i32_9 : i32
    scf.if %11 {
      %c0_10 = arith.constant 0 : index
      %c0_11 = arith.constant 0 : index
      %12 = vector.load %arg7[%c0_10, %c0_11] : memref<16x16xf32, #tpu.memory_space<vmem>>, vector<16x16xf32>
      %13 = arith.truncf %12 : vector<16x16xf32> to vector<16x16xbf16>
      %c0_12 = arith.constant 0 : index
      %c0_13 = arith.constant 0 : index
      %14 = vector.load %arg4[%c0_12, %c0_13] : memref<16x64xbf16, #tpu.memory_space<vmem>>, vector<16x64xbf16>
      %cst_14 = arith.constant dense<0.000000e+00> : vector<16x64xf32>
      %15 = tpu.matmul %13, %14, %cst_14 {dimension_numbers = #tpu.dot_dimension_numbers<[1], [0], [0], [1], [0, 0, 1, 1], [], []>} : vector<16x16xbf16>, vector<16x64xbf16>, vector<16x64xf32> -> vector<16x64xf32>
      %c0_15 = arith.constant 0 : index
      %c0_16 = arith.constant 0 : index
      %16 = vector.load %arg5[%c0_15, %c0_16] : memref<1x64xf32, #tpu.memory_space<vmem>>, vector<1x64xf32>
      %17 = vector.broadcast %16 : vector<1x64xf32> to vector<16x64xf32>
      %18 = arith.addf %15, %17 : vector<16x64xf32>
      %cst_17 = arith.constant 0.000000e+00 : f32
      %19 = vector.broadcast %cst_17 : f32 to vector<16x64xf32>
      %20 = arith.maximumf %18, %19 : vector<16x64xf32>
      %c0_18 = arith.constant 0 : index
      %c0_19 = arith.constant 0 : index
      %21 = vector.load %arg6[%c0_18, %c0_19] : memref<16x64xf32, #tpu.memory_space<vmem>>, vector<16x64xf32>
      tpu.vector_store %arg6[%c0_18, %c0_19], %20 {strides = array<i32>} : memref<16x64xf32, #tpu.memory_space<vmem>>, vector<16x64xf32>,
    } else {
    }
    return
  }
  func.func @transform_0(%arg0: i32, %arg1: i32) -> (i32, i32) {
    %c0_i32 = arith.constant 0 : i32
    return %arg0, %arg1 : i32, i32
  }
  func.func @transform_1(%arg0: i32, %arg1: i32) -> (i32, i32) {
    %c0_i32 = arith.constant 0 : i32
    %c0_i32_0 = arith.constant 0 : i32
    return %arg1, %c0_i32 : i32, i32
  }
  func.func @transform_2(%arg0: i32, %arg1: i32) -> (i32, i32) {
    %c0_i32 = arith.constant 0 : i32
    %c0_i32_0 = arith.constant 0 : i32
    %c0_i32_1 = arith.constant 0 : i32
    return %c0_i32, %c0_i32_0 : i32, i32
  }
  func.func @transform_3(%arg0: i32, %arg1: i32) -> (i32, i32) {
    %c0_i32 = arith.constant 0 : i32
    %c0_i32_0 = arith.constant 0 : i32
    %c0_i32_1 = arith.constant 0 : i32
    return %c0_i32, %c0_i32_0 : i32, i32
  }
  func.func @transform_4(%arg0: i32, %arg1: i32) -> (i32, i32) {
    %c0_i32 = arith.constant 0 : i32
    %c0_i32_0 = arith.constant 0 : i32
    return %arg0, %c0_i32 : i32, i32
  }
}

</mosaic_0001>

<llo_original>
// kernel: tpu_custom_call.1
$region0: #{tpu_custom_call.1}
  #allocation0 [shape = 'u32[]', space=smem, size = 0x4, offset = 0x4, fixed_abs, tag = 'smem constant byte address 0x4 - core index']
  #allocation1 [shape = 'u32[72,128]{1,0:T(1,128)}', space=vmem, size = 0x9000, scoped, tag = 'internal scratch']
  #allocation2 [shape = 'f32[16,16]{1,0:T(8,128)}', space=vmem, size = 0x2000, scoped, tag = 'scratch operand']
  %s0 = inlined_call_operand.hbm [shape: bf16[16,16], index: 0, kind: input, shape index: {}]
  %s1 = inlined_call_operand.hbm [shape: bf16[16,16], index: 1, kind: input, shape index: {}]
  %s2 = inlined_call_operand.hbm [shape: bf16[16,64], index: 2, kind: input, shape index: {}]
  %s3 = inlined_call_operand.vmem [shape: f32[1,64], index: 3, kind: input, shape index: {}]
  %s4 = inlined_call_operand.hbm [shape: f32[16,64], index: 4, kind: output, shape index: {}]
  %s5 = sld [smem:[#allocation0]]
  $region46: #{tpu_custom_call.1} parent=0
    _
  %s7 = ssub.s32 1, %s5
  %s8 = scalar_select 0, %s7, %s5
  $region1: #{tpu_custom_call.1} parent=0
    #allocation3 [shape = 'u8[4096]{0}', space=vmem, size = 0x1000, scoped, tag = 'input window, operand 0, single buffered']
    #allocation4 [shape = 's32[1]{0}', space=sflag, size = 0x4, scoped, tag = 'scoped memory for tpu_custom_call.1']
    #allocation5 [shape = 's32[1]{0}', space=sflag, size = 0x4, scoped, tag = 'scoped memory for tpu_custom_call.1']
    #allocation6 [shape = 'u8[4096]{0}', space=vmem, size = 0x1000, scoped, tag = 'input window, operand 1, single buffered']
    #allocation7 [shape = 's32[1]{0}', space=sflag, size = 0x4, scoped, tag = 'scoped memory for tpu_custom_call.1']
    #allocation8 [shape = 'u8[4096]{0}', space=vmem, size = 0x1000, scoped, tag = 'input window, operand 2, single buffered']
    #allocation9 [shape = 'u8[8192]{0}', space=vmem, size = 0x2000, scoped, tag = 'output window, operand 0, single buffered']
    %9 = vsyncpa [#allocation4], 0
    %10 = vsyncpa [#allocation7], 0
    %11 = vsyncpa [#allocation5], 0
    // Predicated region
    $region2: #{tpu_custom_call.1} parent=1 // pred_check
      _
    $region3: #{tpu_custom_call.1} parent=1 // pred_check_branch
      %13 = sbr.rel (0) target = $region5
    $region4: #{tpu_custom_call.1} parent=1 // pred_region
      %15 = vsyncadd [#allocation4], 0
      %s16 = sshll.u32 %s0, 4
      %s17 = int_to_ptr.hbm [resolvable:$true] %s16
      %s18 = sshll.u32 [#allocation3], 4
      %s19 = int_to_ptr.vmem [resolvable:$true] %s18
      %24 = dma.hbm_to_vmem [thread:$0]  %s17, 128, %s19, [#allocation4], 64, 64, 4
    $region5: #{tpu_custom_call.1} parent=1 // pred_fallthru
      _
    // Predicated region
    $region6: #{tpu_custom_call.1} parent=1 // pred_check
      _
    $region7: #{tpu_custom_call.1} parent=1 // pred_check_branch
      %26 = sbr.rel (0) target = $region9
    $region8: #{tpu_custom_call.1} parent=1 // pred_region
      %28 = vsyncadd [#allocation7], 0
      %s29 = sshll.u32 %s1, 4
      %s30 = int_to_ptr.hbm [resolvable:$true] %s29
      %s31 = sshll.u32 [#allocation6], 4
      %s32 = int_to_ptr.vmem [resolvable:$true] %s31
      %37 = dma.hbm_to_vmem [thread:$0]  %s30, 128, %s32, [#allocation7], 64, 64, 4
    $region9: #{tpu_custom_call.1} parent=1 // pred_fallthru
      _
    // Predicated region
    $region10: #{tpu_custom_call.1} parent=1 // pred_check
      _
    $region11: #{tpu_custom_call.1} parent=1 // pred_check_branch
      %39 = sbr.rel (0) target = $region13
    $region12: #{tpu_custom_call.1} parent=1 // pred_region
      %41 = vsyncadd [#allocation7], 0
      %s42 = sshll.u32 %s2, 4
      %s43 = int_to_ptr.hbm [resolvable:$true] %s42
      %s44 = sshll.u32 [#allocation8], 4
      %s45 = int_to_ptr.vmem [resolvable:$true] %s44
      %50 = dma.hbm_to_vmem [thread:$0]  %s43, 128, %s45, [#allocation7], 64, 64, 4
    $region13: #{tpu_custom_call.1} parent=1 // pred_fallthru
      _
    // Predicated region
    $region14: #{tpu_custom_call.1} parent=1 // pred_check
      _
    $region15: #{tpu_custom_call.1} parent=1 // pred_check_branch
      %52 = sbr.rel (0) target = $region17
    $region16: #{tpu_custom_call.1} parent=1 // pred_region
      _
    $region17: #{tpu_custom_call.1} parent=1 // pred_fallthru
      _
    // Predicated region
    $region18: #{tpu_custom_call.1} parent=1 // pred_check
      _
    $region19: #{tpu_custom_call.1} parent=1 // pred_check_branch
      %54 = sbr.rel (0) target = $region21
    $region20: #{tpu_custom_call.1} parent=1 // pred_region
      %56 = dma.done [#allocation4], 128
    $region21: #{tpu_custom_call.1} parent=1 // pred_fallthru
      _
    // Predicated region
    $region22: #{tpu_custom_call.1} parent=1 // pred_check
      _
    $region23: #{tpu_custom_call.1} parent=1 // pred_check_branch
      %58 = sbr.rel (0) target = $region25
    $region24: #{tpu_custom_call.1} parent=1 // pred_region
      %60 = dma.done [#allocation7], 128
    $region25: #{tpu_custom_call.1} parent=1 // pred_fallthru
      _
    // Predicated region
    $region26: #{tpu_custom_call.1} parent=1 // pred_check
      _
    $region27: #{tpu_custom_call.1} parent=1 // pred_check_branch
      %62 = sbr.rel (0) target = $region29
    $region28: #{tpu_custom_call.1} parent=1 // pred_region
      %64 = dma.done [#allocation7], 128
    $region29: #{tpu_custom_call.1} parent=1 // pred_fallthru
      _
    %p66 = scmp.eq.s32.totalorder 0, 0
    // Predicated region
    $region30: #{tpu_custom_call.1} parent=1 // pred_check
      %p67 = pneg %p66
    $region31: #{tpu_custom_call.1} parent=1 // pred_check_branch
      %69 = sbr.rel (%p67) target = $region33
    $region32: #{tpu_custom_call.1} parent=1 // pred_region
      %vm70 = vcmask 130048
      %71 = vst.msk [vmem:[#allocation2] sm:$0xff] %vm70, 0.0
      %72 = vst.msk [vmem:[#allocation2 + $0x8] sm:$0xff] %vm70, 0.0
    $region33: #{tpu_custom_call.1} parent=1 // pred_fallthru
      _
    %v73 = vld [vmem:[#allocation2] sm:$0xff]
    %v74 = vld [vmem:[#allocation2 + $0x8] sm:$0xff]
    %v75 = vld [vmem:[#allocation3] sm:$0xf]
    %v76 = vld [vmem:[#allocation3 + $0x4] sm:$0xf]
    %v77 = vld [vmem:[#allocation6] sm:$0xf]
    %v78 = vld [vmem:[#allocation6 + $0x4] sm:$0xf]
    %v81 = vunpack.c.l.b16 %v75
    %v82 = vunpack.c.l.b16 %v76
    %v83 = vpack.c.b16 %v82, %v81
    %v86 = vunpack.c.l.b16 %v77
    %v87 = vunpack.c.l.b16 %v78
    %v88 = vpack.c.b16 %v87, %v86
    %vm90 = vcmask 130048
    %v92 = vsel %vm90, %v83, 0
    %94 = vmatpush.bf16.msra.mxu0 0
    %95 = vmatpush.bf16.msra.mxu0 0
    %96 = vmatpush.bf16.msra.mxu0 0
    %97 = vmatpush.bf16.msra.mxu0 0
    %98 = vmatpush.bf16.msra.mxu0 0
    %99 = vmatpush.bf16.msra.mxu0 0
    %100 = vmatpush.bf16.msra.mxu0 0
    %101 = vmatpush.bf16.msra.mxu0 %v88
    %102 = vmatmul.bf16.gmra.mxu0 %v92
    %v103 = vpop.f32.mrf.mxu0
    %v104 = vadd.f32 0.0, %v103
    %v105 = vpop.f32.mrf.mxu0
    %v106 = vadd.f32 0.0, %v105
    %107 = vdwg.mxu0
    %v108 = vadd.f32 %v73, %v104
    %v109 = vadd.f32 %v74, %v106
    %110 = vst.msk [vmem:[#allocation2] sm:$0xff] %vm90, %v108
    %111 = vst.msk [vmem:[#allocation2 + $0x8] sm:$0xff] %vm90, %v109
    // Predicated region
    $region34: #{tpu_custom_call.1} parent=1 // pred_check
      %p112 = pneg %p66
    $region35: #{tpu_custom_call.1} parent=1 // pred_check_branch
      %114 = sbr.rel (%p112) target = $region37
    $region36: #{tpu_custom_call.1} parent=1 // pred_region
      %v115 = vld [vmem:[#allocation2] sm:$0xff]
      %v116 = vld [vmem:[#allocation2 + $0x8] sm:$0xff]
      %v117 = vpack.c.bf16 %v116, %v115
      %v118 = vld [vmem:[#allocation8] sm:$0xf]
      %v119 = vld [vmem:[#allocation8 + $0x4] sm:$0xf]
      %v120 = vld [vmem:[%s3] sm:$0x1]
      %v122 = vperm.slane %v120, 0
      %v126 = vunpack.c.l.b16 %v118
      %v127 = vunpack.c.l.b16 %v119
      %v128 = vpack.c.b16 %v127, %v126
      %v131 = vsel %vm90, %v117, 0
      %133 = vmatpush.bf16.msra.mxu0 0
      %134 = vmatpush.bf16.msra.mxu0 0
      %135 = vmatpush.bf16.msra.mxu0 0
      %136 = vmatpush.bf16.msra.mxu0 0
      %137 = vmatpush.bf16.msra.mxu0 0
      %138 = vmatpush.bf16.msra.mxu0 0
      %139 = vmatpush.bf16.msra.mxu0 0
      %140 = vmatpush.bf16.msra.mxu0 %v128
      %141 = vmatmul.bf16.gmra.mxu0 %v131
      %v142 = vpop.f32.mrf.mxu0
      %v143 = vadd.f32 %v122, %v142
      %v144 = vpop.f32.mrf.mxu0
      %v145 = vadd.f32 %v122, %v144
      %146 = vdwg.mxu0
      %v147 = vmax.f32 %v143, 0.0
      %v148 = vmax.f32 %v145, 0.0
      %vm149 = vcmask 523264
      %150 = vst.msk [vmem:[#allocation9] sm:$0xff] %vm149, %v147
      %151 = vst.msk [vmem:[#allocation9 + $0x8] sm:$0xff] %vm149, %v148
    $region37: #{tpu_custom_call.1} parent=1 // pred_fallthru
      _
    // Predicated region
    $region38: #{tpu_custom_call.1} parent=1 // pred_check
      _
    $region39: #{tpu_custom_call.1} parent=1 // pred_check_branch
      %153 = sbr.rel (0) target = $region41
    $region40: #{tpu_custom_call.1} parent=1 // pred_region
      %155 = vsyncadd [#allocation5], 0
      %s156 = sshll.u32 [#allocation9], 4
      %s157 = int_to_ptr.vmem [resolvable:$true] %s156
      %s158 = sshll.u32 %s4, 4
      %s159 = int_to_ptr.hbm [resolvable:$true] %s158
      %164 = dma.vmem_to_hbm [thread:$0]  %s157, 256, %s159, [#allocation5], 128, 128, 8
    $region41: #{tpu_custom_call.1} parent=1 // pred_fallthru
      _
    // Predicated region
    $region42: #{tpu_custom_call.1} parent=1 // pred_check
      _
    $region43: #{tpu_custom_call.1} parent=1 // pred_check_branch
      %166 = sbr.rel (0) target = $region45
    $region44: #{tpu_custom_call.1} parent=1 // pred_region
      %168 = dma.done [#allocation5], 256
    $region45: #{tpu_custom_call.1} parent=1 // pred_fallthru
      _
    %169 = vsyncpa [#allocation4], 1
    %170 = vsyncpa [#allocation7], 1
    %171 = vsyncpa [#allocation5], 1

// kernel: tpu_custom_call.1
$region0: #{tpu_custom_call.1}
  #allocation0 [shape = 'u32[]', space=smem, size = 0x4, offset = 0x4, fixed_abs, tag = 'smem constant byte address 0x4 - core index']
  #allocation1 [shape = 'u32[72,128]{1,0:T(1,128)}', space=vmem, size = 0x9000, scoped, tag = 'internal scratch']
  #allocation2 [shape = 'f32[16,16]{1,0:T(8,128)}', space=vmem, size = 0x2000, scoped, tag = 'scratch operand']
  %s0 = inlined_call_operand.hbm [shape: bf16[16,16], index: 0, kind: input, shape index: {}]
  %s1 = inlined_call_operand.hbm [shape: bf16[16,16], index: 1, kind: input, shape index: {}]
  %s2 = inlined_call_operand.hbm [shape: bf16[16,64], index: 2, kind: input, shape index: {}]
  %s3 = inlined_call_operand.vmem [shape: f32[1,64], index: 3, kind: input, shape index: {}]
  %s4 = inlined_call_operand.hbm [shape: f32[16,64], index: 4, kind: output, shape index: {}]
  %s5 = sld [smem:[#allocation0]]
  $region46: #{tpu_custom_call.1} parent=0
    _
  %s7 = ssub.s32 1, %s5
  %s8 = scalar_select 0, %s7, %s5
  $region1: #{tpu_custom_call.1} parent=0
    #allocation3 [shape = 'u8[4096]{0}', space=vmem, size = 0x1000, scoped, tag = 'input window, operand 0, single buffered']
    #allocation4 [shape = 's32[1]{0}', space=sflag, size = 0x4, scoped, tag = 'scoped memory for tpu_custom_call.1']
    #allocation5 [shape = 's32[1]{0}', space=sflag, size = 0x4, scoped, tag = 'scoped memory for tpu_custom_call.1']
    #allocation6 [shape = 'u8[4096]{0}', space=vmem, size = 0x1000, scoped, tag = 'input window, operand 1, single buffered']
    #allocation7 [shape = 's32[1]{0}', space=sflag, size = 0x4, scoped, tag = 'scoped memory for tpu_custom_call.1']
    #allocation8 [shape = 'u8[4096]{0}', space=vmem, size = 0x1000, scoped, tag = 'input window, operand 2, single buffered']
    #allocation9 [shape = 'u8[8192]{0}', space=vmem, size = 0x2000, scoped, tag = 'output window, operand 0, single buffered']
    %9 = vsyncpa [#allocation4], 0
    %10 = vsyncpa [#allocation7], 0
    %11 = vsyncpa [#allocation5], 0
    // Predicated region
    $region2: #{tpu_custom_call.1} parent=1 // pred_check
      _
    $region3: #{tpu_custom_call.1} parent=1 // pred_check_branch
      %13 = sbr.rel (0) target = $region5
    $region4: #{tpu_custom_call.1} parent=1 // pred_region
      %15 = vsyncadd [#allocation4], 0
      %s16 = sshll.u32 %s0, 4
      %s17 = int_to_ptr.hbm [resolvable:$true] %s16
      %s18 = sshll.u32 [#allocation3], 4
      %s19 = int_to_ptr.vmem [resolvable:$true] %s18
      %24 = dma.hbm_to_vmem [thread:$0]  %s17, 128, %s19, [#allocation4], 64, 64, 4
    $region5: #{tpu_custom_call.1} parent=1 // pred_fallthru
      _
    // Predicated region
    $region6: #{tpu_custom_call.1} parent=1 // pred_check
      _
    $region7: #{tpu_custom_call.1} parent=1 // pred_check_branch
      %26 = sbr.rel (0) target = $region9
    $region8: #{tpu_custom_call.1} parent=1 // pred_region
      %28 = vsyncadd [#allocation7], 0
      %s29 = sshll.u32 %s1, 4
      %s30 = int_to_ptr.hbm [resolvable:$true] %s29
      %s31 = sshll.u32 [#allocation6], 4
      %s32 = int_to_ptr.vmem [resolvable:$true] %s31
      %37 = dma.hbm_to_vmem [thread:$0]  %s30, 128, %s32, [#allocation7], 64, 64, 4
    $region9: #{tpu_custom_call.1} parent=1 // pred_fallthru
      _
    // Predicated region
    $region10: #{tpu_custom_call.1} parent=1 // pred_check
      _
    $region11: #{tpu_custom_call.1} parent=1 // pred_check_branch
      %39 = sbr.rel (0) target = $region13
    $region12: #{tpu_custom_call.1} parent=1 // pred_region
      %41 = vsyncadd [#allocation7], 0
      %s42 = sshll.u32 %s2, 4
      %s43 = int_to_ptr.hbm [resolvable:$true] %s42
      %s44 = sshll.u32 [#allocation8], 4
      %s45 = int_to_ptr.vmem [resolvable:$true] %s44
      %50 = dma.hbm_to_vmem [thread:$0]  %s43, 128, %s45, [#allocation7], 64, 64, 4
    $region13: #{tpu_custom_call.1} parent=1 // pred_fallthru
      _
    // Predicated region
    $region14: #{tpu_custom_call.1} parent=1 // pred_check
      _
    $region15: #{tpu_custom_call.1} parent=1 // pred_check_branch
      %52 = sbr.rel (0) target = $region17
    $region16: #{tpu_custom_call.1} parent=1 // pred_region
      _
    $region17: #{tpu_custom_call.1} parent=1 // pred_fallthru
      _
    // Predicated region
    $region18: #{tpu_custom_call.1} parent=1 // pred_check
      _
    $region19: #{tpu_custom_call.1} parent=1 // pred_check_branch
      %54 = sbr.rel (0) target = $region21
    $region20: #{tpu_custom_call.1} parent=1 // pred_region
      %56 = dma.done [#allocation4], 128
    $region21: #{tpu_custom_call.1} parent=1 // pred_fallthru
      _
    // Predicated region
    $region22: #{tpu_custom_call.1} parent=1 // pred_check
      _
    $region23: #{tpu_custom_call.1} parent=1 // pred_check_branch
      %58 = sbr.rel (0) target = $region25
    $region24: #{tpu_custom_call.1} parent=1 // pred_region
      %60 = dma.done [#allocation7], 128
    $region25: #{tpu_custom_call.1} parent=1 // pred_fallthru
      _
    // Predicated region
    $region26: #{tpu_custom_call.1} parent=1 // pred_check
      _
    $region27: #{tpu_custom_call.1} parent=1 // pred_check_branch
      %62 = sbr.rel (0) target = $region29
    $region28: #{tpu_custom_call.1} parent=1 // pred_region
      %64 = dma.done [#allocation7], 128
    $region29: #{tpu_custom_call.1} parent=1 // pred_fallthru
      _
    %p66 = scmp.eq.s32.totalorder 0, 0
    // Predicated region
    $region30: #{tpu_custom_call.1} parent=1 // pred_check
      %p67 = pneg %p66
    $region31: #{tpu_custom_call.1} parent=1 // pred_check_branch
      %69 = sbr.rel (%p67) target = $region33
    $region32: #{tpu_custom_call.1} parent=1 // pred_region
      %vm70 = vcmask 130048
      %71 = vst.msk [vmem:[#allocation2] sm:$0xff] %vm70, 0.0
      %72 = vst.msk [vmem:[#allocation2 + $0x8] sm:$0xff] %vm70, 0.0
    $region33: #{tpu_custom_call.1} parent=1 // pred_fallthru
      _
    %v73 = vld [vmem:[#allocation2] sm:$0xff]
    %v74 = vld [vmem:[#allocation2 + $0x8] sm:$0xff]
    %v75 = vld [vmem:[#allocation3] sm:$0xf]
    %v76 = vld [vmem:[#allocation3 + $0x4] sm:$0xf]
    %v77 = vld [vmem:[#allocation6] sm:$0xf]
    %v78 = vld [vmem:[#allocation6 + $0x4] sm:$0xf]
    %v81 = vunpack.c.l.b16 %v75
    %v82 = vunpack.c.l.b16 %v76
    %v83 = vpack.c.b16 %v82, %v81
    %v86 = vunpack.c.l.b16 %v77
    %v87 = vunpack.c.l.b16 %v78
    %v88 = vpack.c.b16 %v87, %v86
    %vm90 = vcmask 130048
    %v92 = vsel %vm90, %v83, 0
    %94 = vmatpush.bf16.msra.mxu0 0
    %95 = vmatpush.bf16.msra.mxu0 0
    %96 = vmatpush.bf16.msra.mxu0 0
    %97 = vmatpush.bf16.msra.mxu0 0
    %98 = vmatpush.bf16.msra.mxu0 0
    %99 = vmatpush.bf16.msra.mxu0 0
    %100 = vmatpush.bf16.msra.mxu0 0
    %101 = vmatpush.bf16.msra.mxu0 %v88
    %102 = vmatmul.bf16.gmra.mxu0 %v92
    %v103 = vpop.f32.mrf.mxu0
    %v104 = vadd.f32 0.0, %v103
    %v105 = vpop.f32.mrf.mxu0
    %v106 = vadd.f32 0.0, %v105
    %107 = vdwg.mxu0
    %v108 = vadd.f32 %v73, %v104
    %v109 = vadd.f32 %v74, %v106
    %110 = vst.msk [vmem:[#allocation2] sm:$0xff] %vm90, %v108
    %111 = vst.msk [vmem:[#allocation2 + $0x8] sm:$0xff] %vm90, %v109
    // Predicated region
    $region34: #{tpu_custom_call.1} parent=1 // pred_check
      %p112 = pneg %p66
    $region35: #{tpu_custom_call.1} parent=1 // pred_check_branch
      %114 = sbr.rel (%p112) target = $region37
    $region36: #{tpu_custom_call.1} parent=1 // pred_region
      %v115 = vld [vmem:[#allocation2] sm:$0xff]
      %v116 = vld [vmem:[#allocation2 + $0x8] sm:$0xff]
      %v117 = vpack.c.bf16 %v116, %v115
      %v118 = vld [vmem:[#allocation8] sm:$0xf]
      %v119 = vld [vmem:[#allocation8 + $0x4] sm:$0xf]
      %v120 = vld [vmem:[%s3] sm:$0x1]
      %v122 = vperm.slane %v120, 0
      %v126 = vunpack.c.l.b16 %v118
      %v127 = vunpack.c.l.b16 %v119
      %v128 = vpack.c.b16 %v127, %v126
      %v131 = vsel %vm90, %v117, 0
      %133 = vmatpush.bf16.msra.mxu0 0
      %134 = vmatpush.bf16.msra.mxu0 0
      %135 = vmatpush.bf16.msra.mxu0 0
      %136 = vmatpush.bf16.msra.mxu0 0
      %137 = vmatpush.bf16.msra.mxu0 0
      %138 = vmatpush.bf16.msra.mxu0 0
      %139 = vmatpush.bf16.msra.mxu0 0
      %140 = vmatpush.bf16.msra.mxu0 %v128
      %141 = vmatmul.bf16.gmra.mxu0 %v131
      %v142 = vpop.f32.mrf.mxu0
      %v143 = vadd.f32 %v122, %v142
      %v144 = vpop.f32.mrf.mxu0
      %v145 = vadd.f32 %v122, %v144
      %146 = vdwg.mxu0
      %v147 = vmax.f32 %v143, 0.0
      %v148 = vmax.f32 %v145, 0.0
      %vm149 = vcmask 523264
      %150 = vst.msk [vmem:[#allocation9] sm:$0xff] %vm149, %v147
      %151 = vst.msk [vmem:[#allocation9 + $0x8] sm:$0xff] %vm149, %v148
    $region37: #{tpu_custom_call.1} parent=1 // pred_fallthru
      _
    // Predicated region
    $region38: #{tpu_custom_call.1} parent=1 // pred_check
      _
    $region39: #{tpu_custom_call.1} parent=1 // pred_check_branch
      %153 = sbr.rel (0) target = $region41
    $region40: #{tpu_custom_call.1} parent=1 // pred_region
      %155 = vsyncadd [#allocation5], 0
      %s156 = sshll.u32 [#allocation9], 4
      %s157 = int_to_ptr.vmem [resolvable:$true] %s156
      %s158 = sshll.u32 %s4, 4
      %s159 = int_to_ptr.hbm [resolvable:$true] %s158
      %164 = dma.vmem_to_hbm [thread:$0]  %s157, 256, %s159, [#allocation5], 128, 128, 8
    $region41: #{tpu_custom_call.1} parent=1 // pred_fallthru
      _
    // Predicated region
    $region42: #{tpu_custom_call.1} parent=1 // pred_check
      _
    $region43: #{tpu_custom_call.1} parent=1 // pred_check_branch
      %166 = sbr.rel (0) target = $region45
    $region44: #{tpu_custom_call.1} parent=1 // pred_region
      %168 = dma.done [#allocation5], 256
    $region45: #{tpu_custom_call.1} parent=1 // pred_fallthru
      _
    %169 = vsyncpa [#allocation4], 1
    %170 = vsyncpa [#allocation7], 1
    %171 = vsyncpa [#allocation5], 1

</llo_original>
